<compile_context>
chip_gen: v6e
topology: v6e:2x2x1
jax: 0.10.0
libtpu: 0.0.40
codegen_flags: <defaults>
</compile_context>

<pallas_src>
import jax
import jax.numpy as jnp
from jax.experimental import pallas as pl
from jax.experimental.pallas import tpu as pltpu

NUM_CLASSES = 8

_SUBLANE = 8


def _round_up(n, m):
    return ((n + m - 1) // m) * m


def _vmem_budget_bytes(tm, D, H, C):
    """Rough VMEM footprint: double-buffered x/out tiles + intermediate + weights."""
    io = 2 * (tm * D * 4 + tm * C * 4)          # x tile (f32) + out tile (f32), 2 buffers
    inter = tm * H * (4 + 2)                    # h in f32 + bf16 repack
    weights = 2 * (D * H * 2 + H * C * 2 + H * 4 + C * 4)
    return io + inter + weights + (4 << 20)     # slack for compiler scratch


def prepare_static_layer_params(w1, b1, w2, b2):
    """One-time parameter prep (hoisted out of the per-call path).

    w1: (D, H), w2: (H, C) -> bf16 MXU operands.
    b1: (H,) or (1, H), b2: (C,) or (1, C) -> f32, shaped (1, out) for broadcast.
    """
    return (
        w1.astype(jnp.bfloat16),
        b1.reshape(1, -1).astype(jnp.float32),
        w2.astype(jnp.bfloat16),
        b2.reshape(1, -1).astype(jnp.float32),
    )


def static_layer_kernel(x_ref, w1_ref, b1_ref, w2_ref, b2_ref, o_ref):
    # In-kernel bf16 cast of the activation tile (review item 1).
    x = x_ref[...].astype(jnp.bfloat16)
    # Linear 1: bf16 operands, f32 accumulation on the MXU.
    h = jnp.dot(x, w1_ref[...], preferred_element_type=jnp.float32)
    h = h + b1_ref[...]                          # (TM, H) + (1, H) broadcast, f32
    # LeakyReLU (PyTorch default negative_slope = 0.01), f32 on the VPU.
    h = jnp.maximum(h, 0.01 * h)
    # Linear 2: cast intermediate to bf16 for the MXU, accumulate in f32.
    out = jnp.dot(h.astype(jnp.bfloat16), w2_ref[...],
                  preferred_element_type=jnp.float32)
    out = out + b2_ref[...]                      # (TM, C) + (1, C) broadcast
    o_ref[...] = out.astype(o_ref.dtype)


def static_layer(x, params, *, tm=512):
    """x: (B, D) f32; params = prepare_static_layer_params(...). Returns (B, C) f32.

    On v7x pick `tm` so that pl.cdiv(B, tm) is an even number >= 2 (feeds both
    TensorCores); on v5e/v6e a single tile is best for small B.
    """
    w1, b1, w2, b2 = params
    B, D = x.shape
    H = w1.shape[1]
    C = w2.shape[1]

    # Batch tile: sublane-aligned, capped at `tm`; ragged B handled by cdiv grid
    # + partial last block (no wrapper-side jnp.pad of x).
    tm_eff = min(tm, _round_up(B, _SUBLANE))
    grid = (pl.cdiv(B, tm_eff),)

    cost = pl.CostEstimate(
        flops=2 * B * (D * H + H * C),
        transcendentals=0,
        bytes_accessed=B * D * 4 + B * C * 4 + D * H * 2 + H * 4 + H * C * 2 + C * 4,
    )
    vmem_limit = min(max(_vmem_budget_bytes(tm_eff, D, H, C), 32 << 20), 64 << 20)

    return pl.pallas_call(
        static_layer_kernel,
        out_shape=jax.ShapeDtypeStruct((B, C), jnp.float32),
        grid_spec=pl.GridSpec(
            grid=grid,
            in_specs=[
                pl.BlockSpec((tm_eff, D), lambda i: (i, 0)),  # activation tile, pipelined
                pl.BlockSpec((D, H), lambda i: (0, 0)),       # w1 resident (bf16)
                pl.BlockSpec((1, H), lambda i: (0, 0)),       # b1 resident (f32)
                pl.BlockSpec((H, C), lambda i: (0, 0)),       # w2 resident (bf16)
                pl.BlockSpec((1, C), lambda i: (0, 0)),       # b2 resident (f32)
            ],
            out_specs=pl.BlockSpec((tm_eff, C), lambda i: (i, 0)),
        ),
        compiler_params=pltpu.CompilerParams(
            dimension_semantics=("parallel",),
            vmem_limit_bytes=vmem_limit,
        ),
        cost_estimate=cost,
    )(x, w1, b1, w2, b2)


def init_linear_params(key, fan_in, fan_out):
    """Deterministic init mimicking torch.nn.Linear defaults (uniform +/- 1/sqrt(fan_in))."""
    kw, kb = jax.random.split(key)
    bound = 1.0 / jnp.sqrt(fan_in)
    # Stored as (in_features, out_features) so the kernel can do x @ W.
    w = jax.random.uniform(kw, (fan_in, fan_out), jnp.float32, -bound, bound)
    b = jax.random.uniform(kb, (1, fan_out), jnp.float32, -bound, bound)
    return w, b


if __name__ == "__main__":
    key = jax.random.PRNGKey(0)
    k_x, k_l1, k_l2 = jax.random.split(key, 3)

    batch = 250            # deliberately ragged: exercises cdiv grid / partial last block
    input_size = 32
    hidden_layers = 64

    x = jax.random.normal(k_x, (batch, input_size), jnp.float32)
    w1, b1 = init_linear_params(k_l1, input_size, hidden_layers)
    w2, b2 = init_linear_params(k_l2, hidden_layers, NUM_CLASSES)

    # One-time parameter prep (done once, outside the per-call path).
    params = prepare_static_layer_params(w1, b1, w2, b2)

    out_single = static_layer(x, params)            # default tm=512 -> single tile
    out_tiled = static_layer(x, params, tm=64)      # multi-step ragged grid path
    out_single, out_tiled = jax.block_until_ready((out_single, out_tiled))

    # Reference in plain JAX with the same bf16 operand rounding as the kernel
    # (f32 accumulation forced via HIGHEST precision).
    xb = x.astype(jnp.bfloat16).astype(jnp.float32)
    w1b = w1.astype(jnp.bfloat16).astype(jnp.float32)
    w2b = w2.astype(jnp.bfloat16).astype(jnp.float32)
    h_ref = jnp.dot(xb, w1b, precision=jax.lax.Precision.HIGHEST) + b1
    h_ref = jnp.maximum(h_ref, 0.01 * h_ref)
    hb = h_ref.astype(jnp.bfloat16).astype(jnp.float32)
    ref = jnp.dot(hb, w2b, precision=jax.lax.Precision.HIGHEST) + b2

    assert out_single.shape == (batch, NUM_CLASSES)
    assert out_tiled.shape == (batch, NUM_CLASSES)
    assert jnp.allclose(out_single, ref, atol=1e-3, rtol=1e-3), "mismatch (single tile)"
    assert jnp.allclose(out_tiled, ref, atol=1e-3, rtol=1e-3), "mismatch (tiled grid)"

    print("KERNEL_OK")
</pallas_src>

<mosaic_0001>
module attributes {stable_mosaic.version = 11 : i64} {
  func.func @static_layer_kernel(%arg0: i32, %arg1: memref<256x32xf32, #tpu.memory_space<vmem>>, %arg2: memref<32x64xbf16, #tpu.memory_space<vmem>>, %arg3: memref<1x64xf32, #tpu.memory_space<vmem>>, %arg4: memref<64x8xbf16, #tpu.memory_space<vmem>>, %arg5: memref<1x8xf32, #tpu.memory_space<vmem>>, %arg6: memref<256x8xf32, #tpu.memory_space<vmem>>) attributes {dimension_semantics = [#tpu.dimension_semantics<parallel>], iteration_bounds = array<i64: 1>, scalar_prefetch = 0 : i64, scratch_operands = 0 : i64, tpu.core_type = #tpu.core_type<tc>, window_params = [{transform_indices = @transform_0, window_bounds = array<i64: 256, 32>}, {pipeline_mode = #tpu.pipeline_mode<synchronous>, transform_indices = @transform_1, window_bounds = array<i64: 32, 64>}, {pipeline_mode = #tpu.pipeline_mode<synchronous>, transform_indices = @transform_2, window_bounds = array<i64: 1, 64>}, {pipeline_mode = #tpu.pipeline_mode<synchronous>, transform_indices = @transform_3, window_bounds = array<i64: 64, 8>}, {pipeline_mode = #tpu.pipeline_mode<synchronous>, transform_indices = @transform_4, window_bounds = array<i64: 1, 8>}, {transform_indices = @transform_5, window_bounds = array<i64: 256, 8>}]} {
    %c0 = arith.constant 0 : index
    %c0_0 = arith.constant 0 : index
    %0 = vector.load %arg1[%c0, %c0_0] : memref<256x32xf32, #tpu.memory_space<vmem>>, vector<256x32xf32>
    %1 = arith.truncf %0 : vector<256x32xf32> to vector<256x32xbf16>
    %c0_1 = arith.constant 0 : index
    %c0_2 = arith.constant 0 : index
    %2 = vector.load %arg2[%c0_1, %c0_2] : memref<32x64xbf16, #tpu.memory_space<vmem>>, vector<32x64xbf16>
    %cst = arith.constant dense<0.000000e+00> : vector<256x64xf32>
    %3 = tpu.matmul %1, %2, %cst {dimension_numbers = #tpu.dot_dimension_numbers<[1], [0], [0], [1], [0, 0, 1, 1], [], []>} : vector<256x32xbf16>, vector<32x64xbf16>, vector<256x64xf32> -> vector<256x64xf32>
    %c0_3 = arith.constant 0 : index
    %c0_4 = arith.constant 0 : index
    %4 = vector.load %arg3[%c0_3, %c0_4] : memref<1x64xf32, #tpu.memory_space<vmem>>, vector<1x64xf32>
    %5 = vector.broadcast %4 : vector<1x64xf32> to vector<256x64xf32>
    %6 = arith.addf %3, %5 : vector<256x64xf32>
    %cst_5 = arith.constant 0.00999999977 : f32
    %7 = vector.broadcast %cst_5 : f32 to vector<256x64xf32>
    %8 = arith.mulf %7, %6 : vector<256x64xf32>
    %9 = arith.maximumf %6, %8 : vector<256x64xf32>
    %10 = arith.truncf %9 : vector<256x64xf32> to vector<256x64xbf16>
    %c0_6 = arith.constant 0 : index
    %c0_7 = arith.constant 0 : index
    %11 = vector.load %arg4[%c0_6, %c0_7] : memref<64x8xbf16, #tpu.memory_space<vmem>>, vector<64x8xbf16>
    %cst_8 = arith.constant dense<0.000000e+00> : vector<256x8xf32>
    %12 = tpu.matmul %10, %11, %cst_8 {dimension_numbers = #tpu.dot_dimension_numbers<[1], [0], [0], [1], [0, 0, 1, 1], [], []>} : vector<256x64xbf16>, vector<64x8xbf16>, vector<256x8xf32> -> vector<256x8xf32>
    %c0_9 = arith.constant 0 : index
    %c0_10 = arith.constant 0 : index
    %13 = vector.load %arg5[%c0_9, %c0_10] : memref<1x8xf32, #tpu.memory_space<vmem>>, vector<1x8xf32>
    %14 = vector.broadcast %13 : vector<1x8xf32> to vector<256x8xf32>
    %15 = arith.addf %12, %14 : vector<256x8xf32>
    %c0_11 = arith.constant 0 : index
    %c0_12 = arith.constant 0 : index
    %16 = vector.load %arg6[%c0_11, %c0_12] : memref<256x8xf32, #tpu.memory_space<vmem>>, vector<256x8xf32>
    tpu.vector_store %arg6[%c0_11, %c0_12], %15 {strides = array<i32>} : memref<256x8xf32, #tpu.memory_space<vmem>>, vector<256x8xf32>,
    return
  }
  func.func @transform_0(%arg0: i32) -> (i32, i32) {
    %c0_i32 = arith.constant 0 : i32
    %c0_i32_0 = arith.constant 0 : i32
    return %arg0, %c0_i32 : i32, i32
  }
  func.func @transform_1(%arg0: i32) -> (i32, i32) {
    %c0_i32 = arith.constant 0 : i32
    %c0_i32_0 = arith.constant 0 : i32
    %c0_i32_1 = arith.constant 0 : i32
    return %c0_i32, %c0_i32_0 : i32, i32
  }
  func.func @transform_2(%arg0: i32) -> (i32, i32) {
    %c0_i32 = arith.constant 0 : i32
    %c0_i32_0 = arith.constant 0 : i32
    %c0_i32_1 = arith.constant 0 : i32
    return %c0_i32, %c0_i32_0 : i32, i32
  }
  func.func @transform_3(%arg0: i32) -> (i32, i32) {
    %c0_i32 = arith.constant 0 : i32
    %c0_i32_0 = arith.constant 0 : i32
    %c0_i32_1 = arith.constant 0 : i32
    return %c0_i32, %c0_i32_0 : i32, i32
  }
  func.func @transform_4(%arg0: i32) -> (i32, i32) {
    %c0_i32 = arith.constant 0 : i32
    %c0_i32_0 = arith.constant 0 : i32
    %c0_i32_1 = arith.constant 0 : i32
    return %c0_i32, %c0_i32_0 : i32, i32
  }
  func.func @transform_5(%arg0: i32) -> (i32, i32) {
    %c0_i32 = arith.constant 0 : i32
    %c0_i32_0 = arith.constant 0 : i32
    return %arg0, %c0_i32 : i32, i32
  }
}

</mosaic_0001>

<llo_original>
// kernel: tpu_custom_call.1
$region0: #{tpu_custom_call.1}
  #allocation0 [shape = 'u32[]', space=smem, size = 0x4, offset = 0x4, fixed_abs, tag = 'smem constant byte address 0x4 - core index']
  #allocation1 [shape = 'u32[144,128]{1,0:T(1,128)}', space=vmem, size = 0x12000, scoped, tag = 'internal scratch']
  %s0 = inlined_call_operand.vmem [shape: f32[250,32], index: 0, kind: input, shape index: {}]
  %s1 = inlined_call_operand.vmem [shape: bf16[32,64], index: 1, kind: input, shape index: {}]
  %s2 = inlined_call_operand.vmem [shape: f32[1,64], index: 2, kind: input, shape index: {}]
  %s3 = inlined_call_operand.vmem [shape: bf16[64,8], index: 3, kind: input, shape index: {}]
  %s4 = inlined_call_operand.vmem [shape: f32[1,8], index: 4, kind: input, shape index: {}]
  %s5 = inlined_call_operand.vmem [shape: f32[250,8], index: 5, kind: output, shape index: {}]
  %s6 = sld [smem:[#allocation0]]
  $region30: #{tpu_custom_call.1} parent=0
    _
  %s8 = ssub.s32 1, %s6
  %s9 = scalar_select 0, %s8, %s6
  // Predicated region
  $region2: #{tpu_custom_call.1} parent=0 // pred_check
    _
  $region3: #{tpu_custom_call.1} parent=0 // pred_check_branch
    %11 = sbr.rel (0) target = $region5
  $region4: #{tpu_custom_call.1} parent=0 // pred_region
    _
  $region5: #{tpu_custom_call.1} parent=0 // pred_fallthru
    _
  // Predicated region
  $region6: #{tpu_custom_call.1} parent=0 // pred_check
    _
  $region7: #{tpu_custom_call.1} parent=0 // pred_check_branch
    %13 = sbr.rel (0) target = $region9
  $region8: #{tpu_custom_call.1} parent=0 // pred_region
    _
  $region9: #{tpu_custom_call.1} parent=0 // pred_fallthru
    _
  // Predicated region
  $region10: #{tpu_custom_call.1} parent=0 // pred_check
    _
  $region11: #{tpu_custom_call.1} parent=0 // pred_check_branch
    %15 = sbr.rel (0) target = $region13
  $region12: #{tpu_custom_call.1} parent=0 // pred_region
    _
  $region13: #{tpu_custom_call.1} parent=0 // pred_fallthru
    _
  // Predicated region
  $region14: #{tpu_custom_call.1} parent=0 // pred_check
    _
  $region15: #{tpu_custom_call.1} parent=0 // pred_check_branch
    %17 = sbr.rel (0) target = $region17
  $region16: #{tpu_custom_call.1} parent=0 // pred_region
    _
  $region17: #{tpu_custom_call.1} parent=0 // pred_fallthru
    _
  // Predicated region
  $region18: #{tpu_custom_call.1} parent=0 // pred_check
    _
  $region19: #{tpu_custom_call.1} parent=0 // pred_check_branch
    %19 = sbr.rel (0) target = $region21
  $region20: #{tpu_custom_call.1} parent=0 // pred_region
    _
  $region21: #{tpu_custom_call.1} parent=0 // pred_fallthru
    _
  %v21 = vld [vmem:[%s0] sm:$0xff]
  %v22 = vld [vmem:[%s0 + $0x8] sm:$0xff]
  %v23 = vld [vmem:[%s0 + $0x10] sm:$0xff]
  %v24 = vld [vmem:[%s0 + $0x18] sm:$0xff]
  %v25 = vld [vmem:[%s0 + $0x20] sm:$0xff]
  %v26 = vld [vmem:[%s0 + $0x28] sm:$0xff]
  %v27 = vld [vmem:[%s0 + $0x30] sm:$0xff]
  %v28 = vld [vmem:[%s0 + $0x38] sm:$0xff]
  %v29 = vld [vmem:[%s0 + $0x40] sm:$0xff]
  %v30 = vld [vmem:[%s0 + $0x48] sm:$0xff]
  %v31 = vld [vmem:[%s0 + $0x50] sm:$0xff]
  %v32 = vld [vmem:[%s0 + $0x58] sm:$0xff]
  %v33 = vld [vmem:[%s0 + $0x60] sm:$0xff]
  %v34 = vld [vmem:[%s0 + $0x68] sm:$0xff]
  %v35 = vld [vmem:[%s0 + $0x70] sm:$0xff]
  %v36 = vld [vmem:[%s0 + $0x78] sm:$0xff]
  %v37 = vld [vmem:[%s0 + $0x80] sm:$0xff]
  %v38 = vld [vmem:[%s0 + $0x88] sm:$0xff]
  %v39 = vld [vmem:[%s0 + $0x90] sm:$0xff]
  %v40 = vld [vmem:[%s0 + $0x98] sm:$0xff]
  %v41 = vld [vmem:[%s0 + $0xa0] sm:$0xff]
  %v42 = vld [vmem:[%s0 + $0xa8] sm:$0xff]
  %v43 = vld [vmem:[%s0 + $0xb0] sm:$0xff]
  %v44 = vld [vmem:[%s0 + $0xb8] sm:$0xff]
  %v45 = vld [vmem:[%s0 + $0xc0] sm:$0xff]
  %v46 = vld [vmem:[%s0 + $0xc8] sm:$0xff]
  %v47 = vld [vmem:[%s0 + $0xd0] sm:$0xff]
  %v48 = vld [vmem:[%s0 + $0xd8] sm:$0xff]
  %v49 = vld [vmem:[%s0 + $0xe0] sm:$0xff]
  %v50 = vld [vmem:[%s0 + $0xe8] sm:$0xff]
  %v51 = vld [vmem:[%s0 + $0xf0] sm:$0xff]
  %v52 = vld [vmem:[%s0 + $0xf8] sm:$0xff]
  %v53 = vpack.c.bf16 %v22, %v21
  %v54 = vpack.c.bf16 %v24, %v23
  %v55 = vpack.c.bf16 %v26, %v25
  %v56 = vpack.c.bf16 %v28, %v27
  %v57 = vpack.c.bf16 %v30, %v29
  %v58 = vpack.c.bf16 %v32, %v31
  %v59 = vpack.c.bf16 %v34, %v33
  %v60 = vpack.c.bf16 %v36, %v35
  %v61 = vpack.c.bf16 %v38, %v37
  %v62 = vpack.c.bf16 %v40, %v39
  %v63 = vpack.c.bf16 %v42, %v41
  %v64 = vpack.c.bf16 %v44, %v43
  %v65 = vpack.c.bf16 %v46, %v45
  %v66 = vpack.c.bf16 %v48, %v47
  %v67 = vpack.c.bf16 %v50, %v49
  %v68 = vpack.c.bf16 %v52, %v51
  %v69 = vld [vmem:[%s1] sm:$0xf]
  %v70 = vld [vmem:[%s1 + $0x4] sm:$0xf]
  %v71 = vld [vmem:[%s1 + $0x8] sm:$0xf]
  %v72 = vld [vmem:[%s1 + $0xc] sm:$0xf]
  %v73 = vld [vmem:[%s2] sm:$0x1]
  %v75 = vlaneseq
  %v76 = vshrl.u32 %v75, 7
  %v77 = vsub.s32 0, %v76
  %v78 = vrot.slane %v73, %v77
  %v84 = vunpack.c.l.b16 %v69
  %v85 = vunpack.c.l.b16 %v70
  %v86 = vunpack.c.l.b16 %v71
  %v87 = vunpack.c.l.b16 %v72
  %v88 = vpack.c.b16 %v85, %v84
  %v89 = vpack.c.b16 %v87, %v86
  %vm92 = vcmask 261120
  %v94 = vsel %vm92, %v53, 0
  %v97 = vsel %vm92, %v54, 0
  %v100 = vsel %vm92, %v55, 0
  %v103 = vsel %vm92, %v56, 0
  %v106 = vsel %vm92, %v57, 0
  %v109 = vsel %vm92, %v58, 0
  %v112 = vsel %vm92, %v59, 0
  %v115 = vsel %vm92, %v60, 0
  %v118 = vsel %vm92, %v61, 0
  %v121 = vsel %vm92, %v62, 0
  %v124 = vsel %vm92, %v63, 0
  %v127 = vsel %vm92, %v64, 0
  %v130 = vsel %vm92, %v65, 0
  %v133 = vsel %vm92, %v66, 0
  %v136 = vsel %vm92, %v67, 0
  %v139 = vsel %vm92, %v68, 0
  %141 = vmatprep.subr.bf16.mxu0 0
  %142 = vmatpush1.bf16.msra.mxu0 0
  %143 = vmatprep.subr.bf16.mxu0 0
  %144 = vmatpush1.bf16.msra.mxu0 0
  %145 = vmatprep.subr.bf16.mxu0 0
  %146 = vmatpush1.bf16.msra.mxu0 0
  %147 = vmatprep.subr.bf16.mxu0 0
  %148 = vmatpush1.bf16.msra.mxu0 0
  %149 = vmatprep.subr.bf16.mxu0 0
  %150 = vmatpush1.bf16.msra.mxu0 0
  %151 = vmatprep.subr.bf16.mxu0 0
  %152 = vmatpush1.bf16.msra.mxu0 0
  %153 = vmatprep.subr.bf16.mxu0 0
  %154 = vmatpush1.bf16.msra.mxu0 %v89
  %155 = vmatprep.subr.bf16.mxu0 0
  %156 = vmatpush1.bf16.msra.mxu0 %v88
  %157 = vmatprep.subr.bf16.mxu0 0
  %158 = vmatpush2.bf16.msra.mxu0 0
  %159 = vmatprep.subr.bf16.mxu0 0
  %160 = vmatpush2.bf16.msra.mxu0 0
  %161 = vmatprep.subr.bf16.mxu0 0
  %162 = vmatpush2.bf16.msra.mxu0 0
  %163 = vmatprep.subr.bf16.mxu0 0
  %164 = vmatpush2.bf16.msra.mxu0 0
  %165 = vmatprep.subr.bf16.mxu0 0
  %166 = vmatpush2.bf16.msra.mxu0 0
  %167 = vmatprep.subr.bf16.mxu0 0
  %168 = vmatpush2.bf16.msra.mxu0 0
  %169 = vmatprep.subr.bf16.mxu0 0
  %170 = vmatpush2.bf16.msra.mxu0 0
  %171 = vmatprep.subr.bf16.mxu0 0
  %172 = vmatpush2.bf16.msra.mxu0 0
  %173 = vmatprep.mubr.bf16.mxu0 0
  %174 = vmatmul.mubr.bf16.gmra.mxu0 %v94
  %v175 = vpop.f32.mrf.mxu0
  %v176 = vadd.f32 %v78, %v175
  %v177 = vpop.f32.mrf.mxu0
  %v178 = vpop.f32.mrf.mxu0
  %v179 = vadd.f32 %v78, %v178
  %v180 = vpop.f32.mrf.mxu0
  %181 = vmatprep.mubr.bf16.mxu0 0
  %182 = vmatmul.mubr.bf16.gmra.mxu0 %v97
  %v183 = vpop.f32.mrf.mxu0
  %v184 = vadd.f32 %v78, %v183
  %v185 = vpop.f32.mrf.mxu0
  %v186 = vpop.f32.mrf.mxu0
  %v187 = vadd.f32 %v78, %v186
  %v188 = vpop.f32.mrf.mxu0
  %189 = vmatprep.mubr.bf16.mxu0 0
  %190 = vmatmul.mubr.bf16.gmra.mxu0 %v100
  %v191 = vpop.f32.mrf.mxu0
  %v192 = vadd.f32 %v78, %v191
  %v193 = vpop.f32.mrf.mxu0
  %v194 = vpop.f32.mrf.mxu0
  %v195 = vadd.f32 %v78, %v194
  %v196 = vpop.f32.mrf.mxu0
  %197 = vmatprep.mubr.bf16.mxu0 0
  %198 = vmatmul.mubr.bf16.gmra.mxu0 %v103
  %v199 = vpop.f32.mrf.mxu0
  %v200 = vadd.f32 %v78, %v199
  %v201 = vpop.f32.mrf.mxu0
  %v202 = vpop.f32.mrf.mxu0
  %v203 = vadd.f32 %v78, %v202
  %v204 = vpop.f32.mrf.mxu0
  %205 = vmatprep.mubr.bf16.mxu0 0
  %206 = vmatmul.mubr.bf16.gmra.mxu0 %v106
  %v207 = vpop.f32.mrf.mxu0
  %v208 = vadd.f32 %v78, %v207
  %v209 = vpop.f32.mrf.mxu0
  %v210 = vpop.f32.mrf.mxu0
  %v211 = vadd.f32 %v78, %v210
  %v212 = vpop.f32.mrf.mxu0
  %213 = vmatprep.mubr.bf16.mxu0 0
  %214 = vmatmul.mubr.bf16.gmra.mxu0 %v109
  %v215 = vpop.f32.mrf.mxu0
  %v216 = vadd.f32 %v78, %v215
  %v217 = vpop.f32.mrf.mxu0
  %v218 = vpop.f32.mrf.mxu0
  %v219 = vadd.f32 %v78, %v218
  %v220 = vpop.f32.mrf.mxu0
  %221 = vmatprep.mubr.bf16.mxu0 0
  %222 = vmatmul.mubr.bf16.gmra.mxu0 %v112
  %v223 = vpop.f32.mrf.mxu0
  %v224 = vadd.f32 %v78, %v223
  %v225 = vpop.f32.mrf.mxu0
  %v226 = vpop.f32.mrf.mxu0
  %v227 = vadd.f32 %v78, %v226
  %v228 = vpop.f32.mrf.mxu0
  %229 = vmatprep.mubr.bf16.mxu0 0
  %230 = vmatmul.mubr.bf16.gmra.mxu0 %v115
  %v231 = vpop.f32.mrf.mxu0
  %v232 = vadd.f32 %v78, %v231
  %v233 = vpop.f32.mrf.mxu0
  %v234 = vpop.f32.mrf.mxu0
  %v235 = vadd.f32 %v78, %v234
  %v236 = vpop.f32.mrf.mxu0
  %237 = vmatprep.mubr.bf16.mxu0 0
  %238 = vmatmul.mubr.bf16.gmra.mxu0 %v118
  %v239 = vpop.f32.mrf.mxu0
  %v240 = vadd.f32 %v78, %v239
  %v241 = vpop.f32.mrf.mxu0
  %v242 = vpop.f32.mrf.mxu0
  %v243 = vadd.f32 %v78, %v242
  %v244 = vpop.f32.mrf.mxu0
  %245 = vmatprep.mubr.bf16.mxu0 0
  %246 = vmatmul.mubr.bf16.gmra.mxu0 %v121
  %v247 = vpop.f32.mrf.mxu0
  %v248 = vadd.f32 %v78, %v247
  %v249 = vpop.f32.mrf.mxu0
  %v250 = vpop.f32.mrf.mxu0
  %v251 = vadd.f32 %v78, %v250
  %v252 = vpop.f32.mrf.mxu0
  %253 = vmatprep.mubr.bf16.mxu0 0
  %254 = vmatmul.mubr.bf16.gmra.mxu0 %v124
  %v255 = vpop.f32.mrf.mxu0
  %v256 = vadd.f32 %v78, %v255
  %v257 = vpop.f32.mrf.mxu0
  %v258 = vpop.f32.mrf.mxu0
  %v259 = vadd.f32 %v78, %v258
  %v260 = vpop.f32.mrf.mxu0
  %261 = vmatprep.mubr.bf16.mxu0 0
  %262 = vmatmul.mubr.bf16.gmra.mxu0 %v127
  %v263 = vpop.f32.mrf.mxu0
  %v264 = vadd.f32 %v78, %v263
  %v265 = vpop.f32.mrf.mxu0
  %v266 = vpop.f32.mrf.mxu0
  %v267 = vadd.f32 %v78, %v266
  %v268 = vpop.f32.mrf.mxu0
  %269 = vmatprep.mubr.bf16.mxu0 0
  %270 = vmatmul.mubr.bf16.gmra.mxu0 %v130
  %v271 = vpop.f32.mrf.mxu0
  %v272 = vadd.f32 %v78, %v271
  %v273 = vpop.f32.mrf.mxu0
  %v274 = vpop.f32.mrf.mxu0
  %v275 = vadd.f32 %v78, %v274
  %v276 = vpop.f32.mrf.mxu0
  %277 = vmatprep.mubr.bf16.mxu0 0
  %278 = vmatmul.mubr.bf16.gmra.mxu0 %v133
  %v279 = vpop.f32.mrf.mxu0
  %v280 = vadd.f32 %v78, %v279
  %v281 = vpop.f32.mrf.mxu0
  %v282 = vpop.f32.mrf.mxu0
  %v283 = vadd.f32 %v78, %v282
  %v284 = vpop.f32.mrf.mxu0
  %285 = vmatprep.mubr.bf16.mxu0 0
  %286 = vmatmul.mubr.bf16.gmra.mxu0 %v136
  %v287 = vpop.f32.mrf.mxu0
  %v288 = vadd.f32 %v78, %v287
  %v289 = vpop.f32.mrf.mxu0
  %v290 = vpop.f32.mrf.mxu0
  %v291 = vadd.f32 %v78, %v290
  %v292 = vpop.f32.mrf.mxu0
  %293 = vmatprep.mubr.bf16.mxu0 0
  %294 = vmatmul.mubr.bf16.gmra.mxu0 %v139
  %v295 = vpop.f32.mrf.mxu0
  %v296 = vadd.f32 %v78, %v295
  %v297 = vpop.f32.mrf.mxu0
  %v298 = vpop.f32.mrf.mxu0
  %v299 = vadd.f32 %v78, %v298
  %v300 = vpop.f32.mrf.mxu0
  %301 = vdwg.mxu0
  %v302 = vmul.f32 %v176, 0.01
  %v303 = vmul.f32 %v179, 0.01
  %v304 = vmul.f32 %v184, 0.01
  %v305 = vmul.f32 %v187, 0.01
  %v306 = vmul.f32 %v192, 0.01
  %v307 = vmul.f32 %v195, 0.01
  %v308 = vmul.f32 %v200, 0.01
  %v309 = vmul.f32 %v203, 0.01
  %v310 = vmul.f32 %v208, 0.01
  %v311 = vmul.f32 %v211, 0.01
  %v312 = vmul.f32 %v216, 0.01
  %v313 = vmul.f32 %v219, 0.01
  %v314 = vmul.f32 %v224, 0.01
  %v315 = vmul.f32 %v227, 0.01
  %v316 = vmul.f32 %v232, 0.01
  %v317 = vmul.f32 %v235, 0.01
  %v318 = vmul.f32 %v240, 0.01
  %v319 = vmul.f32 %v243, 0.01
  %v320 = vmul.f32 %v248, 0.01
  %v321 = vmul.f32 %v251, 0.01
  %v322 = vmul.f32 %v256, 0.01
  %v323 = vmul.f32 %v259, 0.01
  %v324 = vmul.f32 %v264, 0.01
  %v325 = vmul.f32 %v267, 0.01
  %v326 = vmul.f32 %v272, 0.01
  %v327 = vmul.f32 %v275, 0.01
  %v328 = vmul.f32 %v280, 0.01
  %v329 = vmul.f32 %v283, 0.01
  %v330 = vmul.f32 %v288, 0.01
  %v331 = vmul.f32 %v291, 0.01
  %v332 = vmul.f32 %v296, 0.01
  %v333 = vmul.f32 %v299, 0.01
  %v334 = vmax.f32 %v176, %v302
  %v335 = vmax.f32 %v179, %v303
  %v336 = vmax.f32 %v184, %v304
  %v337 = vmax.f32 %v187, %v305
  %v338 = vmax.f32 %v192, %v306
  %v339 = vmax.f32 %v195, %v307
  %v340 = vmax.f32 %v200, %v308
  %v341 = vmax.f32 %v203, %v309
  %v342 = vmax.f32 %v208, %v310
  %v343 = vmax.f32 %v211, %v311
  %v344 = vmax.f32 %v216, %v312
  %v345 = vmax.f32 %v219, %v313
  %v346 = vmax.f32 %v224, %v314
  %v347 = vmax.f32 %v227, %v315
  %v348 = vmax.f32 %v232, %v316
  %v349 = vmax.f32 %v235, %v317
  %v350 = vmax.f32 %v240, %v318
  %v351 = vmax.f32 %v243, %v319
  %v352 = vmax.f32 %v248, %v320
  %v353 = vmax.f32 %v251, %v321
  %v354 = vmax.f32 %v256, %v322
  %v355 = vmax.f32 %v259, %v323
  %v356 = vmax.f32 %v264, %v324
  %v357 = vmax.f32 %v267, %v325
  %v358 = vmax.f32 %v272, %v326
  %v359 = vmax.f32 %v275, %v327
  %v360 = vmax.f32 %v280, %v328
  %v361 = vmax.f32 %v283, %v329
  %v362 = vmax.f32 %v288, %v330
  %v363 = vmax.f32 %v291, %v331
  %v364 = vmax.f32 %v296, %v332
  %v365 = vmax.f32 %v299, %v333
  %v366 = vpack.c.bf16 %v335, %v334
  %v367 = vpack.c.bf16 %v337, %v336
  %v368 = vpack.c.bf16 %v339, %v338
  %v369 = vpack.c.bf16 %v341, %v340
  %v370 = vpack.c.bf16 %v343, %v342
  %v371 = vpack.c.bf16 %v345, %v344
  %v372 = vpack.c.bf16 %v347, %v346
  %v373 = vpack.c.bf16 %v349, %v348
  %v374 = vpack.c.bf16 %v351, %v350
  %v375 = vpack.c.bf16 %v353, %v352
  %v376 = vpack.c.bf16 %v355, %v354
  %v377 = vpack.c.bf16 %v357, %v356
  %v378 = vpack.c.bf16 %v359, %v358
  %v379 = vpack.c.bf16 %v361, %v360
  %v380 = vpack.c.bf16 %v363, %v362
  %v381 = vpack.c.bf16 %v365, %v364
  %v382 = vld [vmem:[%s3] sm:$0xf]
  %v383 = vld [vmem:[%s3 + $0x4] sm:$0xf]
  %v384 = vld [vmem:[%s3 + $0x8] sm:$0xf]
  %v385 = vld [vmem:[%s3 + $0xc] sm:$0xf]
  %v386 = vld [vmem:[%s3 + $0x10] sm:$0xf]
  %v387 = vld [vmem:[%s3 + $0x14] sm:$0xf]
  %v388 = vld [vmem:[%s3 + $0x18] sm:$0xf]
  %v389 = vld [vmem:[%s3 + $0x1c] sm:$0xf]
  %v390 = vld [vmem:[%s4] sm:$0x1]
  %v392 = vlaneseq
  %v393 = vshrl.u32 %v392, 7
  %v394 = vsub.s32 0, %v393
  %v395 = vrot.slane %v390, %v394
  %v405 = vunpack.c.l.b16 %v382
  %v406 = vunpack.c.l.b16 %v383
  %v407 = vunpack.c.l.b16 %v384
  %v408 = vunpack.c.l.b16 %v385
  %v409 = vunpack.c.l.b16 %v386
  %v410 = vunpack.c.l.b16 %v387
  %v411 = vunpack.c.l.b16 %v388
  %v412 = vunpack.c.l.b16 %v389
  %v413 = vpack.c.b16 %v406, %v405
  %v414 = vpack.c.b16 %v408, %v407
  %v415 = vpack.c.b16 %v410, %v409
  %v416 = vpack.c.b16 %v412, %v411
  %vm421 = vcmask 523264
  %v423 = vsel %vm421, %v366, 0
  %v426 = vsel %vm421, %v367, 0
  %v429 = vsel %vm421, %v368, 0
  %v432 = vsel %vm421, %v369, 0
  %v435 = vsel %vm421, %v370, 0
  %v438 = vsel %vm421, %v371, 0
  %v441 = vsel %vm421, %v372, 0
  %v444 = vsel %vm421, %v373, 0
  %v447 = vsel %vm421, %v374, 0
  %v450 = vsel %vm421, %v375, 0
  %v453 = vsel %vm421, %v376, 0
  %v456 = vsel %vm421, %v377, 0
  %v459 = vsel %vm421, %v378, 0
  %v462 = vsel %vm421, %v379, 0
  %v465 = vsel %vm421, %v380, 0
  %v468 = vsel %vm421, %v381, 0
  %470 = vmatprep.subr.bf16.mxu0 0
  %471 = vmatpush1.bf16.msra.mxu0 0
  %472 = vmatprep.subr.bf16.mxu0 0
  %473 = vmatpush1.bf16.msra.mxu0 0
  %474 = vmatprep.subr.bf16.mxu0 0
  %475 = vmatpush1.bf16.msra.mxu0 0
  %476 = vmatprep.subr.bf16.mxu0 0
  %477 = vmatpush1.bf16.msra.mxu0 0
  %478 = vmatprep.subr.bf16.mxu0 0
  %479 = vmatpush1.bf16.msra.mxu0 %v416
  %480 = vmatprep.subr.bf16.mxu0 0
  %481 = vmatpush1.bf16.msra.mxu0 %v415
  %482 = vmatprep.subr.bf16.mxu0 0
  %483 = vmatpush1.bf16.msra.mxu0 %v414
  %484 = vmatprep.subr.bf16.mxu0 0
  %485 = vmatpush1.bf16.msra.mxu0 %v413
  %486 = vmatprep.subr.bf16.mxu0 0
  %487 = vmatpush2.bf16.msra.mxu0 0
  %488 = vmatprep.subr.bf16.mxu0 0
  %489 = vmatpush2.bf16.msra.mxu0 0
  %490 = vmatprep.subr.bf16.mxu0 0
  %491 = vmatpush2.bf16.msra.mxu0 0
  %492 = vmatprep.subr.bf16.mxu0 0
  %493 = vmatpush2.bf16.msra.mxu0 0
  %494 = vmatprep.subr.bf16.mxu0 0
  %495 = vmatpush2.bf16.msra.mxu0 0
  %496 = vmatprep.subr.bf16.mxu0 0
  %497 = vmatpush2.bf16.msra.mxu0 0
  %498 = vmatprep.subr.bf16.mxu0 0
  %499 = vmatpush2.bf16.msra.mxu0 0
  %500 = vmatprep.subr.bf16.mxu0 0
  %501 = vmatpush2.bf16.msra.mxu0 0
  %502 = vmatprep.mubr.bf16.mxu0 0
  %503 = vmatmul.mubr.bf16.gmra.mxu0 %v423
  %v504 = vpop.f32.mrf.mxu0
  %v505 = vadd.f32 %v395, %v504
  %v506 = vpop.f32.mrf.mxu0
  %v507 = vpop.f32.mrf.mxu0
  %v508 = vadd.f32 %v395, %v507
  %v509 = vpop.f32.mrf.mxu0
  %510 = vmatprep.mubr.bf16.mxu0 0
  %511 = vmatmul.mubr.bf16.gmra.mxu0 %v426
  %v512 = vpop.f32.mrf.mxu0
  %v513 = vadd.f32 %v395, %v512
  %v514 = vpop.f32.mrf.mxu0
  %v515 = vpop.f32.mrf.mxu0
  %v516 = vadd.f32 %v395, %v515
  %v517 = vpop.f32.mrf.mxu0
  %518 = vmatprep.mubr.bf16.mxu0 0
  %519 = vmatmul.mubr.bf16.gmra.mxu0 %v429
  %v520 = vpop.f32.mrf.mxu0
  %v521 = vadd.f32 %v395, %v520
  %v522 = vpop.f32.mrf.mxu0
  %v523 = vpop.f32.mrf.mxu0
  %v524 = vadd.f32 %v395, %v523
  %v525 = vpop.f32.mrf.mxu0
  %526 = vmatprep.mubr.bf16.mxu0 0
  %527 = vmatmul.mubr.bf16.gmra.mxu0 %v432
  %v528 = vpop.f32.mrf.mxu0
  %v529 = vadd.f32 %v395, %v528
  %v530 = vpop.f32.mrf.mxu0
  %v531 = vpop.f32.mrf.mxu0
  %v532 = vadd.f32 %v395, %v531
  %v533 = vpop.f32.mrf.mxu0
  %534 = vmatprep.mubr.bf16.mxu0 0
  %535 = vmatmul.mubr.bf16.gmra.mxu0 %v435
  %v536 = vpop.f32.mrf.mxu0
  %v537 = vadd.f32 %v395, %v536
  %v538 = vpop.f32.mrf.mxu0
  %v539 = vpop.f32.mrf.mxu0
  %v540 = vadd.f32 %v395, %v539
  %v541 = vpop.f32.mrf.mxu0
  %542 = vmatprep.mubr.bf16.mxu0 0
  %543 = vmatmul.mubr.bf16.gmra.mxu0 %v438
  %v544 = vpop.f32.mrf.mxu0
  %v545 = vadd.f32 %v395, %v544
  %v546 = vpop.f32.mrf.mxu0
  %v547 = vpop.f32.mrf.mxu0
  %v548 = vadd.f32 %v395, %v547
  %v549 = vpop.f32.mrf.mxu0
  %550 = vmatprep.mubr.bf16.mxu0 0
  %551 = vmatmul.mubr.bf16.gmra.mxu0 %v441
  %v552 = vpop.f32.mrf.mxu0
  %v553 = vadd.f32 %v395, %v552
  %v554 = vpop.f32.mrf.mxu0
  %v555 = vpop.f32.mrf.mxu0
  %v556 = vadd.f32 %v395, %v555
  %v557 = vpop.f32.mrf.mxu0
  %558 = vmatprep.mubr.bf16.mxu0 0
  %559 = vmatmul.mubr.bf16.gmra.mxu0 %v444
  %v560 = vpop.f32.mrf.mxu0
  %v561 = vadd.f32 %v395, %v560
  %v562 = vpop.f32.mrf.mxu0
  %v563 = vpop.f32.mrf.mxu0
  %v564 = vadd.f32 %v395, %v563
  %v565 = vpop.f32.mrf.mxu0
  %566 = vmatprep.mubr.bf16.mxu0 0
  %567 = vmatmul.mubr.bf16.gmra.mxu0 %v447
  %v568 = vpop.f32.mrf.mxu0
  %v569 = vadd.f32 %v395, %v568
  %v570 = vpop.f32.mrf.mxu0
  %v571 = vpop.f32.mrf.mxu0
  %v572 = vadd.f32 %v395, %v571
  %v573 = vpop.f32.mrf.mxu0
  %574 = vmatprep.mubr.bf16.mxu0 0
  %575 = vmatmul.mubr.bf16.gmra.mxu0 %v450
  %v576 = vpop.f32.mrf.mxu0
  %v577 = vadd.f32 %v395, %v576
  %v578 = vpop.f32.mrf.mxu0
  %v579 = vpop.f32.mrf.mxu0
  %v580 = vadd.f32 %v395, %v579
  %v581 = vpop.f32.mrf.mxu0
  %582 = vmatprep.mubr.bf16.mxu0 0
  %583 = vmatmul.mubr.bf16.gmra.mxu0 %v453
  %v584 = vpop.f32.mrf.mxu0
  %v585 = vadd.f32 %v395, %v584
  %v586 = vpop.f32.mrf.mxu0
  %v587 = vpop.f32.mrf.mxu0
  %v588 = vadd.f32 %v395, %v587
  %v589 = vpop.f32.mrf.mxu0
  %590 = vmatprep.mubr.bf16.mxu0 0
  %591 = vmatmul.mubr.bf16.gmra.mxu0 %v456
  %v592 = vpop.f32.mrf.mxu0
  %v593 = vadd.f32 %v395, %v592
  %v594 = vpop.f32.mrf.mxu0
  %v595 = vpop.f32.mrf.mxu0
  %v596 = vadd.f32 %v395, %v595
  %v597 = vpop.f32.mrf.mxu0
  %598 = vmatprep.mubr.bf16.mxu0 0
  %599 = vmatmul.mubr.bf16.gmra.mxu0 %v459
  %v600 = vpop.f32.mrf.mxu0
  %v601 = vadd.f32 %v395, %v600
  %v602 = vpop.f32.mrf.mxu0
  %v603 = vpop.f32.mrf.mxu0
  %v604 = vadd.f32 %v395, %v603
  %v605 = vpop.f32.mrf.mxu0
  %606 = vmatprep.mubr.bf16.mxu0 0
  %607 = vmatmul.mubr.bf16.gmra.mxu0 %v462
  %v608 = vpop.f32.mrf.mxu0
  %v609 = vadd.f32 %v395, %v608
  %v610 = vpop.f32.mrf.mxu0
  %v611 = vpop.f32.mrf.mxu0
  %v612 = vadd.f32 %v395, %v611
  %v613 = vpop.f32.mrf.mxu0
  %614 = vmatprep.mubr.bf16.mxu0 0
  %615 = vmatmul.mubr.bf16.gmra.mxu0 %v465
  %v616 = vpop.f32.mrf.mxu0
  %v617 = vadd.f32 %v395, %v616
  %v618 = vpop.f32.mrf.mxu0
  %v619 = vpop.f32.mrf.mxu0
  %v620 = vadd.f32 %v395, %v619
  %v621 = vpop.f32.mrf.mxu0
  %622 = vmatprep.mubr.bf16.mxu0 0
  %623 = vmatmul.mubr.bf16.gmra.mxu0 %v468
  %v624 = vpop.f32.mrf.mxu0
  %v625 = vadd.f32 %v395, %v624
  %v626 = vpop.f32.mrf.mxu0
  %v627 = vpop.f32.mrf.mxu0
  %v628 = vadd.f32 %v395, %v627
  %v629 = vpop.f32.mrf.mxu0
  %630 = vdwg.mxu0
  %vm631 = vcmask 64512
  %632 = vst.msk [vmem:[%s5] sm:$0xff] %vm631, %v505
  %633 = vst.msk [vmem:[%s5 + $0x8] sm:$0xff] %vm631, %v508
  %634 = vst.msk [vmem:[%s5 + $0x10] sm:$0xff] %vm631, %v513
  %635 = vst.msk [vmem:[%s5 + $0x18] sm:$0xff] %vm631, %v516
  %636 = vst.msk [vmem:[%s5 + $0x20] sm:$0xff] %vm631, %v521
  %637 = vst.msk [vmem:[%s5 + $0x28] sm:$0xff] %vm631, %v524
  %638 = vst.msk [vmem:[%s5 + $0x30] sm:$0xff] %vm631, %v529
  %639 = vst.msk [vmem:[%s5 + $0x38] sm:$0xff] %vm631, %v532
  %640 = vst.msk [vmem:[%s5 + $0x40] sm:$0xff] %vm631, %v537
  %641 = vst.msk [vmem:[%s5 + $0x48] sm:$0xff] %vm631, %v540
  %642 = vst.msk [vmem:[%s5 + $0x50] sm:$0xff] %vm631, %v545
  %643 = vst.msk [vmem:[%s5 + $0x58] sm:$0xff] %vm631, %v548
  %644 = vst.msk [vmem:[%s5 + $0x60] sm:$0xff] %vm631, %v553
  %645 = vst.msk [vmem:[%s5 + $0x68] sm:$0xff] %vm631, %v556
  %646 = vst.msk [vmem:[%s5 + $0x70] sm:$0xff] %vm631, %v561
  %647 = vst.msk [vmem:[%s5 + $0x78] sm:$0xff] %vm631, %v564
  %648 = vst.msk [vmem:[%s5 + $0x80] sm:$0xff] %vm631, %v569
  %649 = vst.msk [vmem:[%s5 + $0x88] sm:$0xff] %vm631, %v572
  %650 = vst.msk [vmem:[%s5 + $0x90] sm:$0xff] %vm631, %v577
  %651 = vst.msk [vmem:[%s5 + $0x98] sm:$0xff] %vm631, %v580
  %652 = vst.msk [vmem:[%s5 + $0xa0] sm:$0xff] %vm631, %v585
  %653 = vst.msk [vmem:[%s5 + $0xa8] sm:$0xff] %vm631, %v588
  %654 = vst.msk [vmem:[%s5 + $0xb0] sm:$0xff] %vm631, %v593
  %655 = vst.msk [vmem:[%s5 + $0xb8] sm:$0xff] %vm631, %v596
  %656 = vst.msk [vmem:[%s5 + $0xc0] sm:$0xff] %vm631, %v601
  %657 = vst.msk [vmem:[%s5 + $0xc8] sm:$0xff] %vm631, %v604
  %658 = vst.msk [vmem:[%s5 + $0xd0] sm:$0xff] %vm631, %v609
  %659 = vst.msk [vmem:[%s5 + $0xd8] sm:$0xff] %vm631, %v612
  %660 = vst.msk [vmem:[%s5 + $0xe0] sm:$0xff] %vm631, %v617
  %661 = vst.msk [vmem:[%s5 + $0xe8] sm:$0xff] %vm631, %v620
  %662 = vst.msk [vmem:[%s5 + $0xf0] sm:$0xff] %vm631, %v625
  %663 = vst.msk [vmem:[%s5 + $0xf8] sm:$0xff] %vm631, %v628
  // Predicated region
  $region22: #{tpu_custom_call.1} parent=0 // pred_check
    _
  $region23: #{tpu_custom_call.1} parent=0 // pred_check_branch
    %665 = sbr.rel (0) target = $region25
  $region24: #{tpu_custom_call.1} parent=0 // pred_region
    _
  $region25: #{tpu_custom_call.1} parent=0 // pred_fallthru
    _
  // Predicated region
  $region26: #{tpu_custom_call.1} parent=0 // pred_check
    _
  $region27: #{tpu_custom_call.1} parent=0 // pred_check_branch
    %667 = sbr.rel (0) target = $region29
  $region28: #{tpu_custom_call.1} parent=0 // pred_region
    _
  $region29: #{tpu_custom_call.1} parent=0 // pred_fallthru
    _

</llo_original>
